<compile_context>
chip_gen: v7x
topology: tpu7x:2x2x1
jax: 0.10.0
libtpu: 0.0.40
codegen_flags: <defaults>
</compile_context>

<pallas_src>
import numpy as np
import jax
import jax.numpy as jnp
from jax.experimental import pallas as pl
from jax.experimental.pallas import tpu as pltpu


def _embed_kernel(idx_ref, table_ref, out_ref):
    # idx_ref:   (TB, 1) int32 — token ids for this block.  For a partial last
    #            block, rows >= n hold stale VMEM values; this is safe ONLY
    #            because the matching output rows are masked on writeback —
    #            do not add any reduction over this block's rows.
    # table_ref: (V, D)  full embedding table, VMEM-resident.
    # out_ref:   (TB, D) gathered embeddings.
    idx = idx_ref[...]                                             # (TB, 1)
    tb = idx.shape[0]
    v = table_ref.shape[0]
    lane_ids = jax.lax.broadcasted_iota(jnp.int32, (tb, v), 1)     # (TB, V)
    one_hot = (lane_ids == idx).astype(table_ref.dtype)            # (TB, V)
    # TODO(synk): for V >= ~256 a bf16 one-hot + bf16 table doubles MXU rate on
    # v6e/v7x (accumulation stays f32), at the cost of bf16-rounding the
    # gathered values; kept in table dtype here to match nn.Embedding exactly.
    # TODO(synk): if V*D*dtype grows to many MiB (v7x VMEM is 64 MiB physical /
    # 32 MiB default scoped), switch to a scalar-prefetch pl.Element(1) row
    # gather with the table left in HBM instead of this resident-table matmul.
    out_ref[...] = jnp.dot(
        one_hot, table_ref[...], preferred_element_type=jnp.float32
    ).astype(out_ref.dtype)


def _round_up(x, m):
    return ((x + m - 1) // m) * m


# Conservative VMEM budget: v5e's 16 MiB default scoped limit (smallest across
# v5e/v6e/v7x), so one tiling choice fits every generation without overriding
# vmem_limit_bytes.
_VMEM_BUDGET = 16 * 1024 * 1024
_TB_HARD_CAP = 4096


def _choose_tb(n, v, d, dtype_bytes):
    """Pick the token-block size TB and the number of grid steps."""
    # Per-token VMEM cost: double-buffered output rows + double-buffered,
    # lane-padded (width 128) id rows + the lane-padded (TB, V) one-hot temp.
    per_row = 2 * d * dtype_bytes + 2 * 128 * 4 + _round_up(v, 128) * 4
    table_bytes = 2 * v * d * dtype_bytes          # double-buffered resident table
    avail = max(_VMEM_BUDGET - table_bytes, 64 * 1024)
    cap = min(_TB_HARD_CAP, max(8, (avail // per_row) // 8 * 8))
    if n <= cap:
        # Small input: one grid step.  Block shape equals the full array, so
        # the (8, 128) divisibility rule does not apply and no padding or
        # masking is needed.
        return n, 1
    # Large input: big tiles amortize the ~0.35 us per-step overhead, but keep
    # >= 4 blocks (>= 2 per TensorCore on v7x) so each core overlaps its
    # output-writeback DMA with compute.
    tb = min(cap, max(8, _round_up(pl.cdiv(n, 4), 8)))
    return tb, pl.cdiv(n, tb)


def element_encoder(element, table):
    """Pallas equivalent of ElementEncoder.forward (embedding lookup).

    element: integer array, any shape; values must lie in [0, num_elements)
    table:   (num_elements, embedding_dim); row 0 is the padding row
             (zeroed by the caller, matching padding_idx=0)
    returns: element.shape + (embedding_dim,), dtype of `table`
    """
    # TODO(synk): `.cuda()` / enable_gpu is a device-placement detail with no
    # Pallas equivalent; lookup semantics are identical.
    orig_shape = element.shape
    idx2d = element.reshape(-1, 1).astype(jnp.int32)       # (N, 1), no pad copy
    n = idx2d.shape[0]
    v, d = table.shape
    tb, num_blocks = _choose_tb(n, v, d, table.dtype.itemsize)

    out = pl.pallas_call(
        _embed_kernel,
        out_shape=jax.ShapeDtypeStruct((n, d), table.dtype),
        grid_spec=pl.GridSpec(
            grid=(num_blocks,),
            in_specs=[
                pl.BlockSpec((tb, 1), lambda i: (i, 0)),    # token-id block
                pl.BlockSpec((v, d), lambda i: (0, 0)),     # full table, resident
            ],
            out_specs=pl.BlockSpec((tb, d), lambda i: (i, 0)),
        ),
        compiler_params=pltpu.CompilerParams(
            dimension_semantics=("parallel",)
        ),
    )(idx2d, table)

    return out.reshape(*orig_shape, d)


if __name__ == "__main__":
    num_elements = 32     # vocab size
    embedding_dim = 128   # lane-aligned hidden size
    batch, seq = 2, 8

    key = jax.random.PRNGKey(0)
    k_tab, k_idx, k_idx2 = jax.random.split(key, 3)

    # nn.Embedding default init: N(0, 1); padding_idx=0 row is zeroed.
    table = jax.random.normal(k_tab, (num_elements, embedding_dim), jnp.float32)
    table = table.at[0].set(0.0)

    element = jax.random.randint(k_idx, (batch, seq), 0, num_elements, jnp.int32)

    out = element_encoder(element, table)
    out = jax.block_until_ready(out)

    # Reference check against a plain JAX gather.
    ref = jnp.take(table, element, axis=0)
    assert out.shape == (batch, seq, embedding_dim)
    assert np.allclose(np.asarray(out), np.asarray(ref), atol=1e-6)

    # Ragged token count (n not a multiple of 8): exercises the
    # block-equals-full-array single-step path.
    element2 = jax.random.randint(k_idx2, (3, 5), 0, num_elements, jnp.int32)
    out2 = jax.block_until_ready(element_encoder(element2, table))
    ref2 = jnp.take(table, element2, axis=0)
    assert out2.shape == (3, 5, embedding_dim)
    assert np.allclose(np.asarray(out2), np.asarray(ref2), atol=1e-6)

    print("KERNEL_OK")
</pallas_src>

<mosaic_0001>
module attributes {stable_mosaic.version = 11 : i64} {
  func.func @_embed_kernel(%arg0: i32, %arg1: memref<16x1xi32, #tpu.memory_space<vmem>>, %arg2: memref<32x128xf32, #tpu.memory_space<vmem>>, %arg3: memref<16x128xf32, #tpu.memory_space<vmem>>) attributes {dimension_semantics = [#tpu.dimension_semantics<parallel>], iteration_bounds = array<i64: 1>, scalar_prefetch = 0 : i64, scratch_operands = 0 : i64, tpu.core_type = #tpu.core_type<tc>, window_params = [{transform_indices = @transform_0, window_bounds = array<i64: 16, 1>}, {pipeline_mode = #tpu.pipeline_mode<synchronous>, transform_indices = @transform_1, window_bounds = array<i64: 32, 128>}, {transform_indices = @transform_2, window_bounds = array<i64: 16, 128>}]} {
    %c0 = arith.constant 0 : index
    %c0_0 = arith.constant 0 : index
    %0 = vector.load %arg1[%c0, %c0_0] : memref<16x1xi32, #tpu.memory_space<vmem>>, vector<16x1xi32>
    %1 = tpu.iota {dimensions = array<i32: 1>} : vector<16x32xi32>
    %2 = vector.broadcast %0 : vector<16x1xi32> to vector<16x32xi32>
    %3 = arith.cmpi eq, %1, %2 : vector<16x32xi32>
    %4 = arith.extui %3 : vector<16x32xi1> to vector<16x32xi32>
    %5 = arith.sitofp %4 : vector<16x32xi32> to vector<16x32xf32>
    %c0_1 = arith.constant 0 : index
    %c0_2 = arith.constant 0 : index
    %6 = vector.load %arg2[%c0_1, %c0_2] : memref<32x128xf32, #tpu.memory_space<vmem>>, vector<32x128xf32>
    %cst = arith.constant dense<0.000000e+00> : vector<16x128xf32>
    %7 = tpu.matmul %5, %6, %cst {dimension_numbers = #tpu.dot_dimension_numbers<[1], [0], [0], [1], [0, 0, 1, 1], [], []>} : vector<16x32xf32>, vector<32x128xf32>, vector<16x128xf32> -> vector<16x128xf32>
    %c0_3 = arith.constant 0 : index
    %c0_4 = arith.constant 0 : index
    %8 = vector.load %arg3[%c0_3, %c0_4] : memref<16x128xf32, #tpu.memory_space<vmem>>, vector<16x128xf32>
    tpu.vector_store %arg3[%c0_3, %c0_4], %7 {strides = array<i32>} : memref<16x128xf32, #tpu.memory_space<vmem>>, vector<16x128xf32>,
    return
  }
  func.func @transform_0(%arg0: i32) -> (i32, i32) {
    %c0_i32 = arith.constant 0 : i32
    %c0_i32_0 = arith.constant 0 : i32
    return %arg0, %c0_i32 : i32, i32
  }
  func.func @transform_1(%arg0: i32) -> (i32, i32) {
    %c0_i32 = arith.constant 0 : i32
    %c0_i32_0 = arith.constant 0 : i32
    %c0_i32_1 = arith.constant 0 : i32
    return %c0_i32, %c0_i32_0 : i32, i32
  }
  func.func @transform_2(%arg0: i32) -> (i32, i32) {
    %c0_i32 = arith.constant 0 : i32
    %c0_i32_0 = arith.constant 0 : i32
    return %arg0, %c0_i32 : i32, i32
  }
}

</mosaic_0001>

<llo_original>
// kernel: tpu_custom_call.1
$region0: #{tpu_custom_call.1}
  #allocation0 [shape = 'u32[]', space=smem, size = 0x4, offset = 0x4, fixed_abs, tag = 'smem constant byte address 0x4 - core index']
  #allocation1 [shape = 'u32[144,128]{1,0:T(1,128)}', space=vmem, size = 0x12000, scoped, tag = 'internal scratch']
  %s0 = inlined_call_operand.vmem [shape: s32[16,1], index: 0, kind: input, shape index: {}]
  %s1 = inlined_call_operand.hbm [shape: f32[32,128], index: 1, kind: input, shape index: {}]
  %s2 = inlined_call_operand.hbm [shape: f32[16,128], index: 2, kind: output, shape index: {}]
  %s3 = sld [smem:[#allocation0]]
  $region22: #{tpu_custom_call.1} parent=0
    _
  %s5 = ssub.s32 1, %s3
  %s6 = scalar_select 0, %s5, %s3
  $region1: #{tpu_custom_call.1} parent=0
    #allocation2 [shape = 'u8[16384]{0}', space=vmem, size = 0x4000, scoped, tag = 'input window, operand 1, single buffered']
    #allocation3 [shape = 's32[1]{0}', space=sflag, size = 0x4, scoped, tag = 'scoped memory for tpu_custom_call.1']
    #allocation4 [shape = 's32[1]{0}', space=sflag, size = 0x4, scoped, tag = 'scoped memory for tpu_custom_call.1']
    #allocation5 [shape = 'u8[8192]{0}', space=vmem, size = 0x2000, scoped, tag = 'output window, operand 0, single buffered']
    %7 = vsyncpa [#allocation3], 0
    %8 = vsyncpa [#allocation4], 0
    // Predicated region
    $region2: #{tpu_custom_call.1} parent=1 // pred_check
      _
    $region3: #{tpu_custom_call.1} parent=1 // pred_check_branch
      %10 = sbr.rel (0) target = $region5
    $region4: #{tpu_custom_call.1} parent=1 // pred_region
      _
    $region5: #{tpu_custom_call.1} parent=1 // pred_fallthru
      _
    // Predicated region
    $region6: #{tpu_custom_call.1} parent=1 // pred_check
      _
    $region7: #{tpu_custom_call.1} parent=1 // pred_check_branch
      %12 = sbr.rel (0) target = $region9
    $region8: #{tpu_custom_call.1} parent=1 // pred_region
      %s14 = ssub.s32 512, 512
      %15 = vsyncadd [#allocation3], %s14
      %s16 = sshll.u32 [#allocation2], 4
      %s17 = int_to_ptr.vmem [resolvable:$true] %s16
      %22 = dma.hbm_to_vmem [thread:$0]  %s1, 512, %s17, [#allocation3], 128, 128, 8
    $region9: #{tpu_custom_call.1} parent=1 // pred_fallthru
      _
    // Predicated region
    $region10: #{tpu_custom_call.1} parent=1 // pred_check
      _
    $region11: #{tpu_custom_call.1} parent=1 // pred_check_branch
      %24 = sbr.rel (0) target = $region13
    $region12: #{tpu_custom_call.1} parent=1 // pred_region
      %25 = dma.done [#allocation3], 512
    $region13: #{tpu_custom_call.1} parent=1 // pred_fallthru
      _
    %v26 = vld [vmem:[%s0] sm:$0xff]
    %v27 = vld [vmem:[%s0 + $0x8] sm:$0xff]
    %v28 = vlaneseq
    %v29 = vand.u32 %v28, 127
    %30 = vset.pattern.permute.xlu0 0
    %31 = vperm.xlu0 %30, %v26
    %v32 = vpop.permute.xlu0 %31
    %33 = vset.pattern.permute.xlu0 0
    %34 = vperm.xlu0 %33, %v27
    %v35 = vpop.permute.xlu0 %34
    %vm36 = vcmp.eq.s32.totalorder %v29, %v32
    %vm37 = vcmp.eq.s32.totalorder %v29, %v35
    %v38 = vsel %vm36, 1, 0
    %v39 = vsel %vm37, 1, 0
    %v40 = vcvt.s32.f32 %v38
    %v41 = vcvt.s32.f32 %v39
    %v42 = vld [vmem:[#allocation2] sm:$0xff]
    %v43 = vld [vmem:[#allocation2 + $0x8] sm:$0xff]
    %v44 = vld [vmem:[#allocation2 + $0x10] sm:$0xff]
    %v45 = vld [vmem:[#allocation2 + $0x18] sm:$0xff]
    %vm46 = vcmask 261120
    %v48 = vsel %vm46, %v40, 0
    %v51 = vsel %vm46, %v41, 0
    %53 = vmatprep.subr.mxu0 0.0
    %54 = vmatpush1.msra.mxu0 %v42
    %55 = vmatprep.subr.mxu0 0.0
    %56 = vmatpush1.msra.mxu0 %v43
    %57 = vmatprep.subr.mxu0 0.0
    %58 = vmatpush1.msra.mxu0 %v44
    %59 = vmatprep.subr.mxu0 0.0
    %60 = vmatpush1.msra.mxu0 %v45
    %61 = vmatprep.subr.mxu0 0.0
    %62 = vmatpush1.msra.mxu0 0.0
    %63 = vmatprep.subr.mxu0 0.0
    %64 = vmatpush1.msra.mxu0 0.0
    %65 = vmatprep.subr.mxu0 0.0
    %66 = vmatpush1.msra.mxu0 0.0
    %67 = vmatprep.subr.mxu0 0.0
    %68 = vmatpush1.msra.mxu0 0.0
    %69 = vmatprep.subr.mxu0 0.0
    %70 = vmatpush1.msra.mxu0 0.0
    %71 = vmatprep.subr.mxu0 0.0
    %72 = vmatpush1.msra.mxu0 0.0
    %73 = vmatprep.subr.mxu0 0.0
    %74 = vmatpush1.msra.mxu0 0.0
    %75 = vmatprep.subr.mxu0 0.0
    %76 = vmatpush1.msra.mxu0 0.0
    %77 = vmatprep.subr.mxu0 0.0
    %78 = vmatpush1.msra.mxu0 0.0
    %79 = vmatprep.subr.mxu0 0.0
    %80 = vmatpush1.msra.mxu0 0.0
    %81 = vmatprep.subr.mxu0 0.0
    %82 = vmatpush1.msra.mxu0 0.0
    %83 = vmatprep.subr.mxu0 0.0
    %84 = vmatpush1.msra.mxu0 0.0
    %85 = vmatprep.subr.mxu0 0.0
    %86 = vmatpush1.msra.mxu0 0.0
    %87 = vmatprep.subr.mxu0 0.0
    %88 = vmatpush1.msra.mxu0 0.0
    %89 = vmatprep.subr.mxu0 0.0
    %90 = vmatpush1.msra.mxu0 0.0
    %91 = vmatprep.subr.mxu0 0.0
    %92 = vmatpush1.msra.mxu0 0.0
    %93 = vmatprep.subr.mxu0 0.0
    %94 = vmatpush1.msra.mxu0 0.0
    %95 = vmatprep.subr.mxu0 0.0
    %96 = vmatpush1.msra.mxu0 0.0
    %97 = vmatprep.subr.mxu0 0.0
    %98 = vmatpush1.msra.mxu0 0.0
    %99 = vmatprep.subr.mxu0 0.0
    %100 = vmatpush1.msra.mxu0 0.0
    %101 = vmatprep.subr.mxu0 0.0
    %102 = vmatpush1.msra.mxu0 0.0
    %103 = vmatprep.subr.mxu0 0.0
    %104 = vmatpush1.msra.mxu0 0.0
    %105 = vmatprep.subr.mxu0 0.0
    %106 = vmatpush1.msra.mxu0 0.0
    %107 = vmatprep.subr.mxu0 0.0
    %108 = vmatpush1.msra.mxu0 0.0
    %109 = vmatprep.subr.mxu0 0.0
    %110 = vmatpush1.msra.mxu0 0.0
    %111 = vmatprep.subr.mxu0 0.0
    %112 = vmatpush1.msra.mxu0 0.0
    %113 = vmatprep.subr.mxu0 0.0
    %114 = vmatpush1.msra.mxu0 0.0
    %115 = vmatprep.subr.mxu0 0.0
    %116 = vmatpush1.msra.mxu0 0.0
    %117 = vmatprep.mubr.f32.mxu0 0.0
    %118 = vmatmul.mubr.f32.gmra.mrb[0].mxu0 %v48
    %v119 = vpop.f32.mrb[0].mxu0
    %v120 = vadd.f32 0.0, %v119
    %v121 = vpop.f32.mrb[0].mxu0
    %122 = vmatprep.mubr.f32.mxu0 0.0
    %123 = vmatmul.mubr.f32.gmra.mrb[0].mxu0 %v51
    %v124 = vpop.f32.mrb[0].mxu0
    %v125 = vadd.f32 0.0, %v124
    %v126 = vpop.f32.mrb[0].mxu0
    %127 = vdwg.mxu0
    %128 = vst [vmem:[#allocation5] sm:$0xff] %v120
    %129 = vst [vmem:[#allocation5 + $0x8] sm:$0xff] %v125
    // Predicated region
    $region14: #{tpu_custom_call.1} parent=1 // pred_check
      _
    $region15: #{tpu_custom_call.1} parent=1 // pred_check_branch
      %131 = sbr.rel (0) target = $region17
    $region16: #{tpu_custom_call.1} parent=1 // pred_region
      %s133 = ssub.s32 256, 256
      %134 = vsyncadd [#allocation4], %s133
      %s135 = sshll.u32 [#allocation5], 4
      %s136 = int_to_ptr.vmem [resolvable:$true] %s135
      %141 = dma.vmem_to_hbm [thread:$0]  %s136, 256, %s2, [#allocation4], 128, 128, 8
    $region17: #{tpu_custom_call.1} parent=1 // pred_fallthru
      _
    // Predicated region
    $region18: #{tpu_custom_call.1} parent=1 // pred_check
      _
    $region19: #{tpu_custom_call.1} parent=1 // pred_check_branch
      %143 = sbr.rel (0) target = $region21
    $region20: #{tpu_custom_call.1} parent=1 // pred_region
      %144 = dma.done [#allocation4], 256
    $region21: #{tpu_custom_call.1} parent=1 // pred_fallthru
      _
    %145 = vsyncpa [#allocation3], 1
    %146 = vsyncpa [#allocation4], 1

</llo_original>
